<compile_context>
chip_gen: v6e
topology: v6e:2x2x1
jax: 0.10.0
libtpu: 0.0.40
codegen_flags: <defaults>
</compile_context>

<pallas_src>
import jax
import jax.numpy as jnp
from jax.experimental import pallas as pl
from jax.experimental.pallas import tpu as pltpu


def predictor_kernel(x_ref, w1_ref, b1_ref, w2_ref, b2_ref, o_ref):
    # x_ref:  (TB, S, H)  VMEM
    # w1_ref: (H, 512)    VMEM (grid-invariant, stays resident)
    # b1_ref: (1, 512)    VMEM
    # w2_ref: (1, 512)    VMEM (second Linear's weight as a row vector)
    # b2_ref: (1, 1)      SMEM scalar
    # o_ref:  (1, TB)     VMEM (lane-dense output: batch on the lane axis)
    inv_s = 1.0 / x_ref.shape[1]                       # static scalar (1/S)

    # torch.mean(x, dim=1): sum over seq, scale folded in after the matmul.
    xs = jnp.sum(x_ref[...], axis=1)                   # (TB, H)

    # Linear(H, 512) + ReLU  (MXU matmul, f32 accumulation)
    h = jnp.dot(xs, w1_ref[...],
                preferred_element_type=jnp.float32) * inv_s + b1_ref[...]
    h = jnp.maximum(h, 0.0)                            # (TB, 512)

    # Linear(512, 1): N=1 matmul replaced by VPU multiply + XLU lane reduction.
    y = jnp.sum(h * w2_ref[...], axis=-1, keepdims=True) + b2_ref[0, 0]   # (TB, 1)

    # Final .mean(dim=-1) over a size-1 axis is the identity -> just store.
    # Store lane-dense as (1, TB).
    o_ref[...] = y.reshape(1, -1).astype(o_ref.dtype)


def predictor_forward(x, w1, b1, w2, b2, *, tb=128):
    B, S, H = x.shape
    N1 = w1.shape[1]                                   # 512
    TB = min(B, tb)                                    # batch rows per grid step
    G = pl.cdiv(B, TB)
    Bp = G * TB
    if Bp != B:
        # Pad batch so it tiles evenly; padded rows are dropped in the wrapper.
        x = jnp.pad(x, ((0, Bp - B), (0, 0), (0, 0)))

    b1_2d = b1.reshape(1, N1)        # (1, 512)
    w2_row = w2.reshape(1, N1)       # (512, 1) -> (1, 512) row vector
    b2_2d = b2.reshape(1, 1)         # scalar, lives in SMEM

    # NOTE(v7x): for large S/H, budget the double-buffered x tile
    # (TB*S*H*4*2 bytes) against the 32 MiB scoped / 64 MiB physical VMEM, or
    # raise vmem_limit_bytes via pltpu.CompilerParams.
    out = pl.pallas_call(
        predictor_kernel,
        out_shape=jax.ShapeDtypeStruct((G, TB), jnp.float32),
        grid=(G,),
        in_specs=[
            pl.BlockSpec((TB, S, H), lambda i: (i, 0, 0)),    # x batch tile
            pl.BlockSpec((H, N1), lambda i: (0, 0)),          # w1 (resident)
            pl.BlockSpec((1, N1), lambda i: (0, 0)),          # b1
            pl.BlockSpec((1, N1), lambda i: (0, 0)),          # w2 row
            pl.BlockSpec(memory_space=pltpu.MemorySpace.SMEM),  # b2 scalar
        ],
        out_specs=pl.BlockSpec((1, TB), lambda i: (i, 0)),    # lane-dense rows
        compiler_params=pltpu.CompilerParams(
            dimension_semantics=("parallel",),                # megacore on v7x
        ),
    )(x, w1, b1_2d, w2_row, b2_2d)

    return out.reshape(Bp)[:B]                                # (B,)


def init_params(key, hidden_size):
    # Deterministic synthetic init (roughly matches nn.Linear's uniform scaling).
    k1, k2, k3, k4 = jax.random.split(key, 4)
    lim1 = 1.0 / jnp.sqrt(hidden_size)
    lim2 = 1.0 / jnp.sqrt(512.0)
    w1 = jax.random.uniform(k1, (hidden_size, 512), jnp.float32, -lim1, lim1)
    b1 = jax.random.uniform(k2, (512,), jnp.float32, -lim1, lim1)
    w2 = jax.random.uniform(k3, (512, 1), jnp.float32, -lim2, lim2)
    b2 = jax.random.uniform(k4, (1,), jnp.float32, -lim2, lim2)
    return w1, b1, w2, b2


if __name__ == "__main__":
    B, S, H = 2, 8, 32                      # batch=2, seq=8, hidden=32
    key = jax.random.PRNGKey(0)
    kx, kp = jax.random.split(key)
    x = jax.random.normal(kx, (B, S, H), jnp.float32)
    w1, b1, w2, b2 = init_params(kp, H)

    out = predictor_forward(x, w1, b1, w2, b2)
    out = jax.block_until_ready(out)

    # Pure-JAX reference for sanity check.
    ref = jnp.mean(
        jnp.maximum(jnp.mean(x, axis=1) @ w1 + b1, 0.0) @ w2 + b2, axis=-1)
    assert out.shape == (B,)
    assert jnp.allclose(out, ref, atol=1e-5, rtol=1e-5)

    print("KERNEL_OK")
</pallas_src>

<mosaic_0001>
module attributes {stable_mosaic.version = 11 : i64} {
  func.func @predictor_kernel(%arg0: i32, %arg1: memref<2x8x32xf32, #tpu.memory_space<vmem>>, %arg2: memref<32x512xf32, #tpu.memory_space<vmem>>, %arg3: memref<1x512xf32, #tpu.memory_space<vmem>>, %arg4: memref<1x512xf32, #tpu.memory_space<vmem>>, %arg5: memref<1x1xf32, #tpu.memory_space<smem>>, %arg6: memref<1x2xf32, #tpu.memory_space<vmem>>) attributes {dimension_semantics = [#tpu.dimension_semantics<parallel>], iteration_bounds = array<i64: 1>, scalar_prefetch = 0 : i64, scratch_operands = 0 : i64, tpu.core_type = #tpu.core_type<tc>, window_params = [{transform_indices = @transform_0, window_bounds = array<i64: 2, 8, 32>}, {pipeline_mode = #tpu.pipeline_mode<synchronous>, transform_indices = @transform_1, window_bounds = array<i64: 32, 512>}, {pipeline_mode = #tpu.pipeline_mode<synchronous>, transform_indices = @transform_2, window_bounds = array<i64: 1, 512>}, {pipeline_mode = #tpu.pipeline_mode<synchronous>, transform_indices = @transform_3, window_bounds = array<i64: 1, 512>}, {transform_indices = @transform_4, window_bounds = array<i64: 1, 1>}, {transform_indices = @transform_5, window_bounds = array<i64: 1, 2>}]} {
    %c0 = arith.constant 0 : index
    %c0_0 = arith.constant 0 : index
    %c0_1 = arith.constant 0 : index
    %0 = vector.load %arg1[%c0, %c0_0, %c0_1] : memref<2x8x32xf32, #tpu.memory_space<vmem>>, vector<2x8x32xf32>
    %cst = arith.constant dense<0.000000e+00> : vector<2x32xf32>
    %1 = vector.multi_reduction <add>, %0, %cst [1] : vector<2x8x32xf32> to vector<2x32xf32>
    %c0_2 = arith.constant 0 : index
    %c0_3 = arith.constant 0 : index
    %2 = vector.load %arg2[%c0_2, %c0_3] : memref<32x512xf32, #tpu.memory_space<vmem>>, vector<32x512xf32>
    %cst_4 = arith.constant dense<0.000000e+00> : vector<2x512xf32>
    %3 = tpu.matmul %1, %2, %cst_4 {dimension_numbers = #tpu.dot_dimension_numbers<[1], [0], [0], [1], [0, 0, 1, 1], [], []>} : vector<2x32xf32>, vector<32x512xf32>, vector<2x512xf32> -> vector<2x512xf32>
    %cst_5 = arith.constant 1.250000e-01 : f32
    %4 = vector.broadcast %cst_5 : f32 to vector<2x512xf32>
    %5 = arith.mulf %3, %4 : vector<2x512xf32>
    %c0_6 = arith.constant 0 : index
    %c0_7 = arith.constant 0 : index
    %6 = vector.load %arg3[%c0_6, %c0_7] : memref<1x512xf32, #tpu.memory_space<vmem>>, vector<1x512xf32>
    %7 = vector.broadcast %6 : vector<1x512xf32> to vector<2x512xf32>
    %8 = arith.addf %5, %7 : vector<2x512xf32>
    %cst_8 = arith.constant 0.000000e+00 : f32
    %9 = vector.broadcast %cst_8 : f32 to vector<2x512xf32>
    %10 = arith.maximumf %8, %9 : vector<2x512xf32>
    %c0_9 = arith.constant 0 : index
    %c0_10 = arith.constant 0 : index
    %11 = vector.load %arg4[%c0_9, %c0_10] : memref<1x512xf32, #tpu.memory_space<vmem>>, vector<1x512xf32>
    %12 = vector.broadcast %11 : vector<1x512xf32> to vector<2x512xf32>
    %13 = arith.mulf %10, %12 : vector<2x512xf32>
    %cst_11 = arith.constant dense<0.000000e+00> : vector<2xf32>
    %14 = vector.multi_reduction <add>, %13, %cst_11 [1] : vector<2x512xf32> to vector<2xf32>
    %15 = vector.shape_cast %14 : vector<2xf32> to vector<2x1xf32>
    %c0_12 = arith.constant 0 : index
    %c0_13 = arith.constant 0 : index
    %16 = memref.load %arg5[%c0_12, %c0_13] : memref<1x1xf32, #tpu.memory_space<smem>>
    %17 = vector.broadcast %16 : f32 to vector<2x1xf32>
    %18 = arith.addf %15, %17 : vector<2x1xf32>
    %19 = vector.shape_cast %18 : vector<2x1xf32> to vector<1x2xf32>
    %c0_14 = arith.constant 0 : index
    %c0_15 = arith.constant 0 : index
    %20 = vector.load %arg6[%c0_14, %c0_15] : memref<1x2xf32, #tpu.memory_space<vmem>>, vector<1x2xf32>
    tpu.vector_store %arg6[%c0_14, %c0_15], %19 {strides = array<i32>} : memref<1x2xf32, #tpu.memory_space<vmem>>, vector<1x2xf32>,
    return
  }
  func.func @transform_0(%arg0: i32) -> (i32, i32, i32) {
    %c0_i32 = arith.constant 0 : i32
    %c0_i32_0 = arith.constant 0 : i32
    %c0_i32_1 = arith.constant 0 : i32
    return %arg0, %c0_i32, %c0_i32_0 : i32, i32, i32
  }
  func.func @transform_1(%arg0: i32) -> (i32, i32) {
    %c0_i32 = arith.constant 0 : i32
    %c0_i32_0 = arith.constant 0 : i32
    %c0_i32_1 = arith.constant 0 : i32
    return %c0_i32, %c0_i32_0 : i32, i32
  }
  func.func @transform_2(%arg0: i32) -> (i32, i32) {
    %c0_i32 = arith.constant 0 : i32
    %c0_i32_0 = arith.constant 0 : i32
    %c0_i32_1 = arith.constant 0 : i32
    return %c0_i32, %c0_i32_0 : i32, i32
  }
  func.func @transform_3(%arg0: i32) -> (i32, i32) {
    %c0_i32 = arith.constant 0 : i32
    %c0_i32_0 = arith.constant 0 : i32
    %c0_i32_1 = arith.constant 0 : i32
    return %c0_i32, %c0_i32_0 : i32, i32
  }
  func.func @transform_4(%arg0: i32) -> (i32, i32) {
    %c0_i32 = arith.constant 0 : i32
    %c0_i32_0 = arith.constant 0 : i32
    %c0_i32_1 = arith.constant 0 : i32
    return %c0_i32, %c0_i32_0 : i32, i32
  }
  func.func @transform_5(%arg0: i32) -> (i32, i32) {
    %c0_i32 = arith.constant 0 : i32
    %c0_i32_0 = arith.constant 0 : i32
    return %arg0, %c0_i32 : i32, i32
  }
}

</mosaic_0001>

<llo_original>
// kernel: tpu_custom_call.1
$region0: #{tpu_custom_call.1}
  #allocation0 [shape = 'u32[]', space=smem, size = 0x4, offset = 0x4, fixed_abs, tag = 'smem constant byte address 0x4 - core index']
  #allocation1 [shape = 'u32[144,128]{1,0:T(1,128)}', space=vmem, size = 0x12000, scoped, tag = 'internal scratch']
  #allocation2 [shape = 'f32[1,1]{1,0:T(1,128)S(6)}', space=smem, size = 0x200, scoped, tag = 'scoped memory for tpu_custom_call.1']
  %s0 = inlined_call_operand.hbm [shape: f32[2,8,32], index: 0, kind: input, shape index: {}]
  %s1 = inlined_call_operand.hbm [shape: f32[32,512], index: 1, kind: input, shape index: {}]
  %s2 = inlined_call_operand.vmem [shape: f32[1,512], index: 2, kind: input, shape index: {}]
  %s3 = inlined_call_operand.hbm [shape: f32[1,512], index: 3, kind: input, shape index: {}]
  %s4 = inlined_call_operand.<no memory space> [shape: f32[1,1], index: 4, kind: input, shape index: {}]
  %s5 = inlined_call_operand.hbm [shape: f32[1,2], index: 5, kind: output, shape index: {}]
  %s6 = sld [smem:[#allocation0]]
  $region42: #{tpu_custom_call.1} parent=0
    _
  %s8 = ssub.s32 1, %s6
  %s9 = scalar_select 0, %s8, %s6
  %10 = sst [smem:[#allocation2]] %s4
  $region1: #{tpu_custom_call.1} parent=0
    #allocation3 [shape = 'u8[8192]{0}', space=vmem, size = 0x2000, scoped, tag = 'input window, operand 0, single buffered']
    #allocation4 [shape = 's32[1]{0}', space=sflag, size = 0x4, scoped, tag = 'scoped memory for tpu_custom_call.1']
    #allocation5 [shape = 's32[1]{0}', space=sflag, size = 0x4, scoped, tag = 'scoped memory for tpu_custom_call.1']
    #allocation6 [shape = 'u8[65536]{0}', space=vmem, size = 0x10000, scoped, tag = 'input window, operand 1, single buffered']
    #allocation7 [shape = 's32[1]{0}', space=sflag, size = 0x4, scoped, tag = 'scoped memory for tpu_custom_call.1']
    #allocation8 [shape = 'u8[2048]{0}', space=vmem, size = 0x800, scoped, tag = 'input window, operand 3, single buffered']
    #allocation9 [shape = 'u8[512]{0}', space=vmem, size = 0x400, scoped, tag = 'output window, operand 0, single buffered']
    %11 = vsyncpa [#allocation4], 0
    %12 = vsyncpa [#allocation7], 0
    %13 = vsyncpa [#allocation5], 0
    // Predicated region
    $region2: #{tpu_custom_call.1} parent=1 // pred_check
      _
    $region3: #{tpu_custom_call.1} parent=1 // pred_check_branch
      %15 = sbr.rel (0) target = $region5
    $region4: #{tpu_custom_call.1} parent=1 // pred_region
      %s17 = ssub.s32 256, 256
      %18 = vsyncadd [#allocation4], %s17
      %s19 = sshll.u32 [#allocation3], 4
      %s20 = int_to_ptr.vmem [resolvable:$true] %s19
      %25 = dma.hbm_to_vmem [thread:$0]  %s0, 256, %s20, [#allocation4], 128, 128, 8
    $region5: #{tpu_custom_call.1} parent=1 // pred_fallthru
      _
    // Predicated region
    $region6: #{tpu_custom_call.1} parent=1 // pred_check
      _
    $region7: #{tpu_custom_call.1} parent=1 // pred_check_branch
      %27 = sbr.rel (0) target = $region9
    $region8: #{tpu_custom_call.1} parent=1 // pred_region
      %s29 = ssub.s32 2048, 2048
      %30 = vsyncadd [#allocation7], %s29
      %s31 = sshll.u32 [#allocation6], 4
      %s32 = int_to_ptr.vmem [resolvable:$true] %s31
      %37 = dma.hbm_to_vmem [thread:$0]  %s1, 2048, %s32, [#allocation7], 512, 512, 32
    $region9: #{tpu_custom_call.1} parent=1 // pred_fallthru
      _
    // Predicated region
    $region10: #{tpu_custom_call.1} parent=1 // pred_check
      _
    $region11: #{tpu_custom_call.1} parent=1 // pred_check_branch
      %39 = sbr.rel (0) target = $region13
    $region12: #{tpu_custom_call.1} parent=1 // pred_region
      _
    $region13: #{tpu_custom_call.1} parent=1 // pred_fallthru
      _
    // Predicated region
    $region14: #{tpu_custom_call.1} parent=1 // pred_check
      _
    $region15: #{tpu_custom_call.1} parent=1 // pred_check_branch
      %41 = sbr.rel (0) target = $region17
    $region16: #{tpu_custom_call.1} parent=1 // pred_region
      %s43 = ssub.s32 64, 64
      %44 = vsyncadd [#allocation7], %s43
      %s46 = sshll.u32 [#allocation8], 4
      %s47 = int_to_ptr.vmem [resolvable:$true] %s46
      %49 = dma.hbm_to_vmem [thread:$0]  %s3, 64, %s47, [#allocation7]
    $region17: #{tpu_custom_call.1} parent=1 // pred_fallthru
      _
    // Predicated region
    $region18: #{tpu_custom_call.1} parent=1 // pred_check
      _
    $region19: #{tpu_custom_call.1} parent=1 // pred_check_branch
      %51 = sbr.rel (0) target = $region21
    $region20: #{tpu_custom_call.1} parent=1 // pred_region
      _
    $region21: #{tpu_custom_call.1} parent=1 // pred_fallthru
      _
    // Predicated region
    $region22: #{tpu_custom_call.1} parent=1 // pred_check
      _
    $region23: #{tpu_custom_call.1} parent=1 // pred_check_branch
      %53 = sbr.rel (0) target = $region25
    $region24: #{tpu_custom_call.1} parent=1 // pred_region
      %54 = dma.done [#allocation4], 256
    $region25: #{tpu_custom_call.1} parent=1 // pred_fallthru
      _
    // Predicated region
    $region26: #{tpu_custom_call.1} parent=1 // pred_check
      _
    $region27: #{tpu_custom_call.1} parent=1 // pred_check_branch
      %56 = sbr.rel (0) target = $region29
    $region28: #{tpu_custom_call.1} parent=1 // pred_region
      %57 = dma.done [#allocation7], 2048
    $region29: #{tpu_custom_call.1} parent=1 // pred_fallthru
      _
    // Predicated region
    $region30: #{tpu_custom_call.1} parent=1 // pred_check
      _
    $region31: #{tpu_custom_call.1} parent=1 // pred_check_branch
      %59 = sbr.rel (0) target = $region33
    $region32: #{tpu_custom_call.1} parent=1 // pred_region
      %60 = dma.done [#allocation7], 64
    $region33: #{tpu_custom_call.1} parent=1 // pred_fallthru
      _
    %v61 = vld [vmem:[#allocation3] sm:$0xff]
    %v62 = vld [vmem:[#allocation3 + $0x8] sm:$0xff]
    %vm63 = vcmask 261120
    %v64 = vsel %vm63, %v61, 0.0
    %v65 = vrot.slane %v64, 4
    %v66 = vadd.f32 %v64, %v65
    %v67 = vrot.slane %v66, 2
    %v68 = vadd.f32 %v66, %v67
    %v69 = vrot.slane %v68, 1
    %v70 = vadd.f32 %v68, %v69
    %v71 = vsel %vm63, %v62, 0.0
    %v72 = vrot.slane %v71, 4
    %v73 = vadd.f32 %v71, %v72
    %v74 = vrot.slane %v73, 2
    %v75 = vadd.f32 %v73, %v74
    %v76 = vrot.slane %v75, 1
    %v77 = vadd.f32 %v75, %v76
    %v78 = vld [vmem:[#allocation6] sm:$0xff]
    %v79 = vld [vmem:[#allocation6 + $0x8] sm:$0xff]
    %v80 = vld [vmem:[#allocation6 + $0x10] sm:$0xff]
    %v81 = vld [vmem:[#allocation6 + $0x18] sm:$0xff]
    %v82 = vld [vmem:[#allocation6 + $0x20] sm:$0xff]
    %v83 = vld [vmem:[#allocation6 + $0x28] sm:$0xff]
    %v84 = vld [vmem:[#allocation6 + $0x30] sm:$0xff]
    %v85 = vld [vmem:[#allocation6 + $0x38] sm:$0xff]
    %v86 = vld [vmem:[#allocation6 + $0x40] sm:$0xff]
    %v87 = vld [vmem:[#allocation6 + $0x48] sm:$0xff]
    %v88 = vld [vmem:[#allocation6 + $0x50] sm:$0xff]
    %v89 = vld [vmem:[#allocation6 + $0x58] sm:$0xff]
    %v90 = vld [vmem:[#allocation6 + $0x60] sm:$0xff]
    %v91 = vld [vmem:[#allocation6 + $0x68] sm:$0xff]
    %v92 = vld [vmem:[#allocation6 + $0x70] sm:$0xff]
    %v93 = vld [vmem:[#allocation6 + $0x78] sm:$0xff]
    %vm96 = vcmask 1041409
    %v97 = vsel %vm96, %v77, %v70
    %v98 = vsel %vm63, %v97, 0
    %100 = vmatprep.subr.mxu0 0.0
    %101 = vmatpush1.msra.mxu0 0.0
    %102 = vmatprep.subr.mxu0 0.0
    %103 = vmatpush1.msra.mxu0 0.0
    %104 = vmatprep.subr.mxu0 0.0
    %105 = vmatpush1.msra.mxu0 0.0
    %106 = vmatprep.subr.mxu0 0.0
    %107 = vmatpush1.msra.mxu0 0.0
    %108 = vmatprep.subr.mxu0 0.0
    %109 = vmatpush1.msra.mxu0 0.0
    %110 = vmatprep.subr.mxu0 0.0
    %111 = vmatpush1.msra.mxu0 0.0
    %112 = vmatprep.subr.mxu0 0.0
    %113 = vmatpush1.msra.mxu0 0.0
    %114 = vmatprep.subr.mxu0 0.0
    %115 = vmatpush1.msra.mxu0 0.0
    %116 = vmatprep.subr.mxu0 0.0
    %117 = vmatpush1.msra.mxu0 0.0
    %118 = vmatprep.subr.mxu0 0.0
    %119 = vmatpush1.msra.mxu0 0.0
    %120 = vmatprep.subr.mxu0 0.0
    %121 = vmatpush1.msra.mxu0 0.0
    %122 = vmatprep.subr.mxu0 0.0
    %123 = vmatpush1.msra.mxu0 0.0
    %124 = vmatprep.subr.mxu0 %v91
    %125 = vmatpush1.msra.mxu0 %v90
    %126 = vmatprep.subr.mxu0 %v87
    %127 = vmatpush1.msra.mxu0 %v86
    %128 = vmatprep.subr.mxu0 %v83
    %129 = vmatpush1.msra.mxu0 %v82
    %130 = vmatprep.subr.mxu0 %v79
    %131 = vmatpush1.msra.mxu0 %v78
    %132 = vmatprep.subr.mxu0 0.0
    %133 = vmatpush2.msra.mxu0 0.0
    %134 = vmatprep.subr.mxu0 0.0
    %135 = vmatpush2.msra.mxu0 0.0
    %136 = vmatprep.subr.mxu0 0.0
    %137 = vmatpush2.msra.mxu0 0.0
    %138 = vmatprep.subr.mxu0 0.0
    %139 = vmatpush2.msra.mxu0 0.0
    %140 = vmatprep.subr.mxu0 0.0
    %141 = vmatpush2.msra.mxu0 0.0
    %142 = vmatprep.subr.mxu0 0.0
    %143 = vmatpush2.msra.mxu0 0.0
    %144 = vmatprep.subr.mxu0 0.0
    %145 = vmatpush2.msra.mxu0 0.0
    %146 = vmatprep.subr.mxu0 0.0
    %147 = vmatpush2.msra.mxu0 0.0
    %148 = vmatprep.subr.mxu0 0.0
    %149 = vmatpush2.msra.mxu0 0.0
    %150 = vmatprep.subr.mxu0 0.0
    %151 = vmatpush2.msra.mxu0 0.0
    %152 = vmatprep.subr.mxu0 0.0
    %153 = vmatpush2.msra.mxu0 0.0
    %154 = vmatprep.subr.mxu0 0.0
    %155 = vmatpush2.msra.mxu0 0.0
    %156 = vmatprep.subr.mxu0 0.0
    %157 = vmatpush2.msra.mxu0 0.0
    %158 = vmatprep.subr.mxu0 0.0
    %159 = vmatpush2.msra.mxu0 0.0
    %160 = vmatprep.subr.mxu0 0.0
    %161 = vmatpush2.msra.mxu0 0.0
    %162 = vmatprep.subr.mxu0 0.0
    %163 = vmatpush2.msra.mxu0 0.0
    %164 = vmatprep.mubr.f32.mxu0 0.0
    %165 = vmatmul.mubr.f32.gmra.mxu0 %v98
    %v166 = vpop.f32.mrf.mxu0
    %v167 = vadd.f32 0.0, %v166
    %v168 = vpop.f32.mrf.mxu0
    %v169 = vadd.f32 0.0, %v168
    %170 = vdwg.mxu0
    %171 = vmatprep.subr.mxu0 0.0
    %172 = vmatpush1.msra.mxu0 0.0
    %173 = vmatprep.subr.mxu0 0.0
    %174 = vmatpush1.msra.mxu0 0.0
    %175 = vmatprep.subr.mxu0 0.0
    %176 = vmatpush1.msra.mxu0 0.0
    %177 = vmatprep.subr.mxu0 0.0
    %178 = vmatpush1.msra.mxu0 0.0
    %179 = vmatprep.subr.mxu0 0.0
    %180 = vmatpush1.msra.mxu0 0.0
    %181 = vmatprep.subr.mxu0 0.0
    %182 = vmatpush1.msra.mxu0 0.0
    %183 = vmatprep.subr.mxu0 0.0
    %184 = vmatpush1.msra.mxu0 0.0
    %185 = vmatprep.subr.mxu0 0.0
    %186 = vmatpush1.msra.mxu0 0.0
    %187 = vmatprep.subr.mxu0 0.0
    %188 = vmatpush1.msra.mxu0 0.0
    %189 = vmatprep.subr.mxu0 0.0
    %190 = vmatpush1.msra.mxu0 0.0
    %191 = vmatprep.subr.mxu0 0.0
    %192 = vmatpush1.msra.mxu0 0.0
    %193 = vmatprep.subr.mxu0 0.0
    %194 = vmatpush1.msra.mxu0 0.0
    %195 = vmatprep.subr.mxu0 %v93
    %196 = vmatpush1.msra.mxu0 %v92
    %197 = vmatprep.subr.mxu0 %v89
    %198 = vmatpush1.msra.mxu0 %v88
    %199 = vmatprep.subr.mxu0 %v85
    %200 = vmatpush1.msra.mxu0 %v84
    %201 = vmatprep.subr.mxu0 %v81
    %202 = vmatpush1.msra.mxu0 %v80
    %203 = vmatprep.subr.mxu0 0.0
    %204 = vmatpush2.msra.mxu0 0.0
    %205 = vmatprep.subr.mxu0 0.0
    %206 = vmatpush2.msra.mxu0 0.0
    %207 = vmatprep.subr.mxu0 0.0
    %208 = vmatpush2.msra.mxu0 0.0
    %209 = vmatprep.subr.mxu0 0.0
    %210 = vmatpush2.msra.mxu0 0.0
    %211 = vmatprep.subr.mxu0 0.0
    %212 = vmatpush2.msra.mxu0 0.0
    %213 = vmatprep.subr.mxu0 0.0
    %214 = vmatpush2.msra.mxu0 0.0
    %215 = vmatprep.subr.mxu0 0.0
    %216 = vmatpush2.msra.mxu0 0.0
    %217 = vmatprep.subr.mxu0 0.0
    %218 = vmatpush2.msra.mxu0 0.0
    %219 = vmatprep.subr.mxu0 0.0
    %220 = vmatpush2.msra.mxu0 0.0
    %221 = vmatprep.subr.mxu0 0.0
    %222 = vmatpush2.msra.mxu0 0.0
    %223 = vmatprep.subr.mxu0 0.0
    %224 = vmatpush2.msra.mxu0 0.0
    %225 = vmatprep.subr.mxu0 0.0
    %226 = vmatpush2.msra.mxu0 0.0
    %227 = vmatprep.subr.mxu0 0.0
    %228 = vmatpush2.msra.mxu0 0.0
    %229 = vmatprep.subr.mxu0 0.0
    %230 = vmatpush2.msra.mxu0 0.0
    %231 = vmatprep.subr.mxu0 0.0
    %232 = vmatpush2.msra.mxu0 0.0
    %233 = vmatprep.subr.mxu0 0.0
    %234 = vmatpush2.msra.mxu0 0.0
    %235 = vmatprep.mubr.f32.mxu0 0.0
    %236 = vmatmul.mubr.f32.gmra.mxu0 %v98
    %v237 = vpop.f32.mrf.mxu0
    %v238 = vadd.f32 0.0, %v237
    %v239 = vpop.f32.mrf.mxu0
    %v240 = vadd.f32 0.0, %v239
    %241 = vdwg.mxu0
    %v242 = vmul.f32 %v167, 0.125
    %v243 = vmul.f32 %v169, 0.125
    %v244 = vmul.f32 %v238, 0.125
    %v245 = vmul.f32 %v240, 0.125
    %v246 = vld [vmem:[%s2] sm:$0xf]
    %v248 = vlaneseq
    %v249 = vshrl.u32 %v248, 7
    %v250 = vsub.s32 0, %v249
    %v251 = vrot.slane %v246, %v250
    %v252 = vlaneseq
    %v253 = vshrl.u32 %v252, 7
    %v254 = vsub.s32 1, %v253
    %v255 = vrot.slane %v246, %v254
    %v256 = vlaneseq
    %v257 = vshrl.u32 %v256, 7
    %v258 = vsub.s32 2, %v257
    %v259 = vrot.slane %v246, %v258
    %v260 = vlaneseq
    %v261 = vshrl.u32 %v260, 7
    %v262 = vsub.s32 3, %v261
    %v263 = vrot.slane %v246, %v262
    %v268 = vadd.f32 %v242, %v251
    %v269 = vadd.f32 %v243, %v255
    %v270 = vadd.f32 %v244, %v259
    %v271 = vadd.f32 %v245, %v263
    %v272 = vmax.f32 %v268, 0.0
    %v273 = vmax.f32 %v269, 0.0
    %v274 = vmax.f32 %v270, 0.0
    %v275 = vmax.f32 %v271, 0.0
    %v276 = vld [vmem:[#allocation8] sm:$0xf]
    %v278 = vlaneseq
    %v279 = vshrl.u32 %v278, 7
    %v280 = vsub.s32 0, %v279
    %v281 = vrot.slane %v276, %v280
    %v282 = vlaneseq
    %v283 = vshrl.u32 %v282, 7
    %v284 = vsub.s32 1, %v283
    %v285 = vrot.slane %v276, %v284
    %v286 = vlaneseq
    %v287 = vshrl.u32 %v286, 7
    %v288 = vsub.s32 2, %v287
    %v289 = vrot.slane %v276, %v288
    %v290 = vlaneseq
    %v291 = vshrl.u32 %v290, 7
    %v292 = vsub.s32 3, %v291
    %v293 = vrot.slane %v276, %v292
    %v298 = vmul.f32 %v272, %v281
    %v299 = vmul.f32 %v273, %v285
    %v300 = vmul.f32 %v274, %v289
    %v301 = vmul.f32 %v275, %v293
    %vm302 = vcmask 1041408
    %v303 = vsel %vm302, %v298, 0.0
    %v304 = vsel %vm302, %v299, 0.0
    %v305 = vadd.f32 %v303, %v304
    %v306 = vsel %vm302, %v300, 0.0
    %v307 = vadd.f32 %v305, %v306
    %v308 = vsel %vm302, %v301, 0.0
    %v309 = vadd.f32 %v307, %v308
    %310 = vadd.xlane.f32.xlu0 %v309
    %v311 = vpop.xlane.xlu0 %310
    %s312 = sld [smem:[#allocation2]]
    %v313 = vstv %s312
    %v314 = vadd.f32 %v311, %v313
    %v316 = vlaneseq
    %v317 = vand.u32 %v316, 127
    %v318 = vlaneseq
    %v319 = vshrl.u32 %v318, 7
    %v320 = vsub.s32 %v317, %v319
    %v321 = vrot.slane %v314, %v320
    %vm323 = vcmask 8192
    %324 = vst.msk [vmem:[#allocation9] sm:$0x1] %vm323, %v321
    // Predicated region
    $region34: #{tpu_custom_call.1} parent=1 // pred_check
      _
    $region35: #{tpu_custom_call.1} parent=1 // pred_check_branch
      %326 = sbr.rel (0) target = $region37
    $region36: #{tpu_custom_call.1} parent=1 // pred_region
      %s328 = ssub.s32 16, 16
      %329 = vsyncadd [#allocation5], %s328
      %s331 = sshll.u32 [#allocation9], 4
      %s332 = int_to_ptr.vmem [resolvable:$true] %s331
      %334 = dma.vmem_to_hbm [thread:$0]  %s332, 16, %s5, [#allocation5]
    $region37: #{tpu_custom_call.1} parent=1 // pred_fallthru
      _
    // Predicated region
    $region38: #{tpu_custom_call.1} parent=1 // pred_check
      _
    $region39: #{tpu_custom_call.1} parent=1 // pred_check_branch
      %336 = sbr.rel (0) target = $region41
    $region40: #{tpu_custom_call.1} parent=1 // pred_region
      %337 = dma.done [#allocation5], 16
    $region41: #{tpu_custom_call.1} parent=1 // pred_fallthru
      _
    %338 = vsyncpa [#allocation4], 1
    %339 = vsyncpa [#allocation7], 1
    %340 = vsyncpa [#allocation5], 1

</llo_original>
